<compile_context>
chip_gen: v6e
topology: v6e:2x2x1
jax: 0.10.0
libtpu: 0.0.40
codegen_flags: <defaults>
</compile_context>

<pallas_src>
import jax
import jax.numpy as jnp
from jax.experimental import pallas as pl
from jax.experimental.pallas import tpu as pltpu


def _round_up(x, m):
    return ((x + m - 1) // m) * m


def _make_ffn_kernel(mxu_dtype):
    """Build the 3-layer MLP kernel; mxu_dtype=None keeps f32 MXU operands."""

    def kernel(x_ref, w1_ref, b1_ref, w2_ref, b2_ref, w3_ref, b3_ref, o_ref):
        def mm(w_ref, a):
            w = w_ref[...]
            if mxu_dtype is not None:
                w = w.astype(mxu_dtype)
                a = a.astype(mxu_dtype)
            return jnp.dot(w, a, preferred_element_type=jnp.float32)

        # x_ref: (D_in, tile) -- batch on the 128-lane axis (lane-dense).
        x = x_ref[...]
        # Layer 1: (d_h1, D_in) @ (D_in, tile) -> (d_h1, tile)
        h = jnp.tanh(mm(w1_ref, x) + b1_ref[...])
        # Layer 2: (d_h2, d_h1) @ (d_h1, tile) -> (d_h2, tile)
        h = jnp.tanh(mm(w2_ref, h) + b2_ref[...])
        # Layer 3 (no activation): (D_out, d_h2) @ (d_h2, tile) -> (D_out, tile)
        y = mm(w3_ref, h) + b3_ref[...]
        o_ref[...] = y.astype(o_ref.dtype)

    return kernel


def _choose_tile(n, max_tile):
    """Lane tile: multiple of 128, as big as allowed, but >=2 grid steps when
    the batch is large enough (keeps both v7x TensorCores busy)."""
    tile = min(max_tile, _round_up(n, 128))
    if n >= 2 * 128:
        tile = min(tile, _round_up(pl.cdiv(n, 2), 128))
    return max(128, tile)


def feed_forward_pallas_fm(x_t, params, *, batch_tile=32768, mxu_dtype=None):
    """Feature-major entry: x_t of shape (D_in, N) -> (D_out, N).

    No wrapper-side pad/slice/transpose: keep this layout in the surrounding
    graph to avoid redundant HBM passes around a memory-bound kernel.
    """
    w1, b1, w2, b2, w3, b3 = params  # weights (out, in), biases (out, 1)
    d_in, n = x_t.shape
    d_h1, d_h2, d_out = w1.shape[0], w2.shape[0], w3.shape[0]

    tile = _choose_tile(n, batch_tile)
    grid = (pl.cdiv(n, tile),)  # ragged final block: reads padded, writes clipped

    flops = 2 * n * (d_in * d_h1 + d_h1 * d_h2 + d_h2 * d_out)
    transcendentals = n * (d_h1 + d_h2)
    param_bytes = 4 * (
        d_h1 * d_in + d_h1 + d_h2 * d_h1 + d_h2 + d_out * d_h2 + d_out
    )
    bytes_accessed = x_t.dtype.itemsize * n * d_in + 4 * n * d_out + param_bytes
    cost = pl.CostEstimate(
        flops=flops, transcendentals=transcendentals, bytes_accessed=bytes_accessed
    )

    # Weights / biases: full-array blocks, constant index -> resident in VMEM.
    def _full(shape):
        return pl.BlockSpec(shape, lambda i: (0, 0))

    return pl.pallas_call(
        _make_ffn_kernel(mxu_dtype),
        out_shape=jax.ShapeDtypeStruct((d_out, n), x_t.dtype),
        grid=grid,
        in_specs=[
            pl.BlockSpec((d_in, tile), lambda i: (0, i)),  # x^T tile (lane-dense)
            _full((d_h1, d_in)),
            _full((d_h1, 1)),
            _full((d_h2, d_h1)),
            _full((d_h2, 1)),
            _full((d_out, d_h2)),
            _full((d_out, 1)),
        ],
        out_specs=pl.BlockSpec((d_out, tile), lambda i: (0, i)),
        compiler_params=pltpu.CompilerParams(
            dimension_semantics=("parallel",),
            vmem_limit_bytes=64 * 1024 * 1024,
        ),
        cost_estimate=cost,
    )(x_t, w1, b1, w2, b2, w3, b3)


def feed_forward_pallas(x, params, *, batch_tile=32768, mxu_dtype=None):
    """Module-layout wrapper: x (N, D_in) -> (N, D_out).

    The two transposes are pure layout plumbing to honor the torch contract;
    callers that can keep a feature-major (D, N) layout should use
    feed_forward_pallas_fm directly and skip them.
    """
    out_t = feed_forward_pallas_fm(
        x.T, params, batch_tile=batch_tile, mxu_dtype=mxu_dtype
    )
    return out_t.T


def init_params(key, d_in, inner_size, d_out, dtype=jnp.float32):
    """Deterministic init matching nn.Linear shapes (weight (out, in), bias (out, 1))."""
    dims = [d_in, inner_size, inner_size, d_out]
    params = []
    for i in range(len(dims) - 1):
        key, kw, kb = jax.random.split(key, 3)
        fan_in = dims[i]
        bound = 1.0 / jnp.sqrt(fan_in)
        w = jax.random.uniform(
            kw, (dims[i + 1], dims[i]), dtype=dtype, minval=-bound, maxval=bound
        )
        b = jax.random.uniform(
            kb, (dims[i + 1], 1), dtype=dtype, minval=-bound, maxval=bound
        )
        params += [w, b]
    return tuple(params)


def _reference(x, params):
    w1, b1, w2, b2, w3, b3 = params
    h = jnp.tanh(x @ w1.T + b1.T)
    h = jnp.tanh(h @ w2.T + b2.T)
    return h @ w3.T + b3.T


if __name__ == "__main__":
    # input_variables = ['x', 'y', 't'] -> D_in = 3
    # output_variables = ['u', 'v']     -> D_out = 2
    # inner_size = 20, n_layers = 2, func = Tanh, extra_features = None
    d_in, inner_size, d_out = 3, 20, 2

    key = jax.random.PRNGKey(0)
    key, kx = jax.random.split(key)
    params = init_params(key, d_in, inner_size, d_out)

    # Ragged batch (not a multiple of the 128-lane tile) -> exercises the
    # clipped final block without any wrapper-side padding.
    batch = 16
    x = jax.random.normal(kx, (batch, d_in), dtype=jnp.float32)
    out = jax.block_until_ready(feed_forward_pallas(x, params))
    ref = _reference(x, params)
    assert out.shape == (batch, d_out)
    assert jnp.allclose(out, ref, atol=1e-5, rtol=1e-5), "f32 mismatch (ragged N)"

    # Multi-step grid with a ragged tail (>=2 steps -> v7x megacore sharding).
    batch2 = 300
    key, kx2 = jax.random.split(key)
    x2 = jax.random.normal(kx2, (batch2, d_in), dtype=jnp.float32)
    out2 = jax.block_until_ready(feed_forward_pallas(x2, params, batch_tile=256))
    ref2 = _reference(x2, params)
    assert out2.shape == (batch2, d_out)
    assert jnp.allclose(out2, ref2, atol=1e-5, rtol=1e-5), "f32 mismatch (multi-step)"

    # Optional bf16 MXU-operand path (v6e/v7x recommendation); accumulation,
    # bias-add and tanh stay f32, so only a looser tolerance is needed.
    out_bf = jax.block_until_ready(
        feed_forward_pallas(x, params, mxu_dtype=jnp.bfloat16)
    )
    assert jnp.allclose(out_bf, ref, atol=5e-2, rtol=5e-2), "bf16 mismatch"

    # TODO(synk): LabelTensor wrapping (attaching output_variables labels) and
    # the extra_features branch have no array-level equivalent; the kernel
    # returns the raw (N, D_out) tensor for extra_features=None.
    print("KERNEL_OK")
</pallas_src>

<mosaic_0001>
module attributes {stable_mosaic.version = 11 : i64} {
  func.func @kernel(%arg0: i32, %arg1: memref<3x128xf32, #tpu.memory_space<vmem>>, %arg2: memref<20x3xf32, #tpu.memory_space<vmem>>, %arg3: memref<20x1xf32, #tpu.memory_space<vmem>>, %arg4: memref<20x20xf32, #tpu.memory_space<vmem>>, %arg5: memref<20x1xf32, #tpu.memory_space<vmem>>, %arg6: memref<2x20xf32, #tpu.memory_space<vmem>>, %arg7: memref<2x1xf32, #tpu.memory_space<vmem>>, %arg8: memref<2x128xf32, #tpu.memory_space<vmem>>) attributes {dimension_semantics = [#tpu.dimension_semantics<parallel>], iteration_bounds = array<i64: 1>, scalar_prefetch = 0 : i64, scratch_operands = 0 : i64, tpu.core_type = #tpu.core_type<tc>, window_params = [{transform_indices = @transform_0, window_bounds = array<i64: 3, 128>}, {pipeline_mode = #tpu.pipeline_mode<synchronous>, transform_indices = @transform_1, window_bounds = array<i64: 20, 3>}, {pipeline_mode = #tpu.pipeline_mode<synchronous>, transform_indices = @transform_2, window_bounds = array<i64: 20, 1>}, {pipeline_mode = #tpu.pipeline_mode<synchronous>, transform_indices = @transform_3, window_bounds = array<i64: 20, 20>}, {pipeline_mode = #tpu.pipeline_mode<synchronous>, transform_indices = @transform_4, window_bounds = array<i64: 20, 1>}, {pipeline_mode = #tpu.pipeline_mode<synchronous>, transform_indices = @transform_5, window_bounds = array<i64: 2, 20>}, {pipeline_mode = #tpu.pipeline_mode<synchronous>, transform_indices = @transform_6, window_bounds = array<i64: 2, 1>}, {transform_indices = @transform_7, window_bounds = array<i64: 2, 128>}]} {
    %c0 = arith.constant 0 : index
    %c0_0 = arith.constant 0 : index
    %0 = vector.load %arg1[%c0, %c0_0] : memref<3x128xf32, #tpu.memory_space<vmem>>, vector<3x128xf32>
    %c0_1 = arith.constant 0 : index
    %c0_2 = arith.constant 0 : index
    %1 = vector.load %arg2[%c0_1, %c0_2] : memref<20x3xf32, #tpu.memory_space<vmem>>, vector<20x3xf32>
    %cst = arith.constant dense<0.000000e+00> : vector<20x128xf32>
    %2 = tpu.matmul %1, %0, %cst {dimension_numbers = #tpu.dot_dimension_numbers<[1], [0], [0], [1], [0, 0, 1, 1], [], []>} : vector<20x3xf32>, vector<3x128xf32>, vector<20x128xf32> -> vector<20x128xf32>
    %c0_3 = arith.constant 0 : index
    %c0_4 = arith.constant 0 : index
    %3 = vector.load %arg3[%c0_3, %c0_4] : memref<20x1xf32, #tpu.memory_space<vmem>>, vector<20x1xf32>
    %4 = vector.broadcast %3 : vector<20x1xf32> to vector<20x128xf32>
    %5 = arith.addf %2, %4 : vector<20x128xf32>
    %6 = math.tanh %5 : vector<20x128xf32>
    %c0_5 = arith.constant 0 : index
    %c0_6 = arith.constant 0 : index
    %7 = vector.load %arg4[%c0_5, %c0_6] : memref<20x20xf32, #tpu.memory_space<vmem>>, vector<20x20xf32>
    %cst_7 = arith.constant dense<0.000000e+00> : vector<20x128xf32>
    %8 = tpu.matmul %7, %6, %cst_7 {dimension_numbers = #tpu.dot_dimension_numbers<[1], [0], [0], [1], [0, 0, 1, 1], [], []>} : vector<20x20xf32>, vector<20x128xf32>, vector<20x128xf32> -> vector<20x128xf32>
    %c0_8 = arith.constant 0 : index
    %c0_9 = arith.constant 0 : index
    %9 = vector.load %arg5[%c0_8, %c0_9] : memref<20x1xf32, #tpu.memory_space<vmem>>, vector<20x1xf32>
    %10 = vector.broadcast %9 : vector<20x1xf32> to vector<20x128xf32>
    %11 = arith.addf %8, %10 : vector<20x128xf32>
    %12 = math.tanh %11 : vector<20x128xf32>
    %c0_10 = arith.constant 0 : index
    %c0_11 = arith.constant 0 : index
    %13 = vector.load %arg6[%c0_10, %c0_11] : memref<2x20xf32, #tpu.memory_space<vmem>>, vector<2x20xf32>
    %cst_12 = arith.constant dense<0.000000e+00> : vector<2x128xf32>
    %14 = tpu.matmul %13, %12, %cst_12 {dimension_numbers = #tpu.dot_dimension_numbers<[1], [0], [0], [1], [0, 0, 1, 1], [], []>} : vector<2x20xf32>, vector<20x128xf32>, vector<2x128xf32> -> vector<2x128xf32>
    %c0_13 = arith.constant 0 : index
    %c0_14 = arith.constant 0 : index
    %15 = vector.load %arg7[%c0_13, %c0_14] : memref<2x1xf32, #tpu.memory_space<vmem>>, vector<2x1xf32>
    %16 = vector.broadcast %15 : vector<2x1xf32> to vector<2x128xf32>
    %17 = arith.addf %14, %16 : vector<2x128xf32>
    %c0_15 = arith.constant 0 : index
    %c0_16 = arith.constant 0 : index
    %18 = vector.load %arg8[%c0_15, %c0_16] : memref<2x128xf32, #tpu.memory_space<vmem>>, vector<2x128xf32>
    tpu.vector_store %arg8[%c0_15, %c0_16], %17 {strides = array<i32>} : memref<2x128xf32, #tpu.memory_space<vmem>>, vector<2x128xf32>,
    return
  }
  func.func @transform_0(%arg0: i32) -> (i32, i32) {
    %c0_i32 = arith.constant 0 : i32
    %c0_i32_0 = arith.constant 0 : i32
    return %c0_i32, %arg0 : i32, i32
  }
  func.func @transform_1(%arg0: i32) -> (i32, i32) {
    %c0_i32 = arith.constant 0 : i32
    %c0_i32_0 = arith.constant 0 : i32
    %c0_i32_1 = arith.constant 0 : i32
    return %c0_i32, %c0_i32_0 : i32, i32
  }
  func.func @transform_2(%arg0: i32) -> (i32, i32) {
    %c0_i32 = arith.constant 0 : i32
    %c0_i32_0 = arith.constant 0 : i32
    %c0_i32_1 = arith.constant 0 : i32
    return %c0_i32, %c0_i32_0 : i32, i32
  }
  func.func @transform_3(%arg0: i32) -> (i32, i32) {
    %c0_i32 = arith.constant 0 : i32
    %c0_i32_0 = arith.constant 0 : i32
    %c0_i32_1 = arith.constant 0 : i32
    return %c0_i32, %c0_i32_0 : i32, i32
  }
  func.func @transform_4(%arg0: i32) -> (i32, i32) {
    %c0_i32 = arith.constant 0 : i32
    %c0_i32_0 = arith.constant 0 : i32
    %c0_i32_1 = arith.constant 0 : i32
    return %c0_i32, %c0_i32_0 : i32, i32
  }
  func.func @transform_5(%arg0: i32) -> (i32, i32) {
    %c0_i32 = arith.constant 0 : i32
    %c0_i32_0 = arith.constant 0 : i32
    %c0_i32_1 = arith.constant 0 : i32
    return %c0_i32, %c0_i32_0 : i32, i32
  }
  func.func @transform_6(%arg0: i32) -> (i32, i32) {
    %c0_i32 = arith.constant 0 : i32
    %c0_i32_0 = arith.constant 0 : i32
    %c0_i32_1 = arith.constant 0 : i32
    return %c0_i32, %c0_i32_0 : i32, i32
  }
  func.func @transform_7(%arg0: i32) -> (i32, i32) {
    %c0_i32 = arith.constant 0 : i32
    %c0_i32_0 = arith.constant 0 : i32
    return %c0_i32, %arg0 : i32, i32
  }
}

</mosaic_0001>

<llo_original>
// kernel: tpu_custom_call.1
$region0: #{tpu_custom_call.1}
  #allocation0 [shape = 'u32[]', space=smem, size = 0x4, offset = 0x4, fixed_abs, tag = 'smem constant byte address 0x4 - core index']
  #allocation1 [shape = 'u32[144,128]{1,0:T(1,128)}', space=vmem, size = 0x12000, scoped, tag = 'internal scratch']
  %s0 = inlined_call_operand.vmem [shape: f32[3,16], index: 0, kind: input, shape index: {}]
  %s1 = inlined_call_operand.vmem [shape: f32[20,3], index: 1, kind: input, shape index: {}]
  %s2 = inlined_call_operand.vmem [shape: f32[20,1], index: 2, kind: input, shape index: {}]
  %s3 = inlined_call_operand.vmem [shape: f32[20,20], index: 3, kind: input, shape index: {}]
  %s4 = inlined_call_operand.vmem [shape: f32[20,1], index: 4, kind: input, shape index: {}]
  %s5 = inlined_call_operand.vmem [shape: f32[2,20], index: 5, kind: input, shape index: {}]
  %s6 = inlined_call_operand.vmem [shape: f32[2,1], index: 6, kind: input, shape index: {}]
  %s7 = inlined_call_operand.hbm [shape: f32[2,16], index: 7, kind: output, shape index: {}]
  %s8 = sld [smem:[#allocation0]]
  $region38: #{tpu_custom_call.1} parent=0
    _
  %s10 = ssub.s32 1, %s8
  %s11 = scalar_select 0, %s10, %s8
  $region1: #{tpu_custom_call.1} parent=0
    #allocation2 [shape = 'u8[1024]{0}', space=vmem, size = 0x400, scoped, tag = 'output window, operand 0, single buffered']
    #allocation3 [shape = 's32[1]{0}', space=sflag, size = 0x4, scoped, tag = 'scoped memory for tpu_custom_call.1']
    %12 = vsyncpa [#allocation3], 0
    // Predicated region
    $region2: #{tpu_custom_call.1} parent=1 // pred_check
      _
    $region3: #{tpu_custom_call.1} parent=1 // pred_check_branch
      %14 = sbr.rel (0) target = $region5
    $region4: #{tpu_custom_call.1} parent=1 // pred_region
      _
    $region5: #{tpu_custom_call.1} parent=1 // pred_fallthru
      _
    // Predicated region
    $region6: #{tpu_custom_call.1} parent=1 // pred_check
      _
    $region7: #{tpu_custom_call.1} parent=1 // pred_check_branch
      %16 = sbr.rel (0) target = $region9
    $region8: #{tpu_custom_call.1} parent=1 // pred_region
      _
    $region9: #{tpu_custom_call.1} parent=1 // pred_fallthru
      _
    // Predicated region
    $region10: #{tpu_custom_call.1} parent=1 // pred_check
      _
    $region11: #{tpu_custom_call.1} parent=1 // pred_check_branch
      %18 = sbr.rel (0) target = $region13
    $region12: #{tpu_custom_call.1} parent=1 // pred_region
      _
    $region13: #{tpu_custom_call.1} parent=1 // pred_fallthru
      _
    // Predicated region
    $region14: #{tpu_custom_call.1} parent=1 // pred_check
      _
    $region15: #{tpu_custom_call.1} parent=1 // pred_check_branch
      %20 = sbr.rel (0) target = $region17
    $region16: #{tpu_custom_call.1} parent=1 // pred_region
      _
    $region17: #{tpu_custom_call.1} parent=1 // pred_fallthru
      _
    // Predicated region
    $region18: #{tpu_custom_call.1} parent=1 // pred_check
      _
    $region19: #{tpu_custom_call.1} parent=1 // pred_check_branch
      %22 = sbr.rel (0) target = $region21
    $region20: #{tpu_custom_call.1} parent=1 // pred_region
      _
    $region21: #{tpu_custom_call.1} parent=1 // pred_fallthru
      _
    // Predicated region
    $region22: #{tpu_custom_call.1} parent=1 // pred_check
      _
    $region23: #{tpu_custom_call.1} parent=1 // pred_check_branch
      %24 = sbr.rel (0) target = $region25
    $region24: #{tpu_custom_call.1} parent=1 // pred_region
      _
    $region25: #{tpu_custom_call.1} parent=1 // pred_fallthru
      _
    // Predicated region
    $region26: #{tpu_custom_call.1} parent=1 // pred_check
      _
    $region27: #{tpu_custom_call.1} parent=1 // pred_check_branch
      %26 = sbr.rel (0) target = $region29
    $region28: #{tpu_custom_call.1} parent=1 // pred_region
      _
    $region29: #{tpu_custom_call.1} parent=1 // pred_fallthru
      _
    %v27 = vld [vmem:[%s0] sm:$0x7]
    %v28 = vld [vmem:[%s1] sm:$0xff]
    %v29 = vld [vmem:[%s1 + $0x8] sm:$0xff]
    %v30 = vld [vmem:[%s1 + $0x10] sm:$0xf]
    %v31 = vld [vmem:[%s2] sm:$0xff]
    %v32 = vld [vmem:[%s2 + $0x8] sm:$0xff]
    %v33 = vld [vmem:[%s2 + $0x10] sm:$0xf]
    %35 = vset.pattern.permute.xlu0 0
    %36 = vperm.xlu0 %35, %v31
    %v37 = vpop.permute.xlu0 %36
    %40 = vset.pattern.permute.xlu0 0
    %41 = vperm.xlu0 %40, %v32
    %v42 = vpop.permute.xlu0 %41
    %45 = vset.pattern.permute.xlu0 0
    %46 = vperm.xlu0 %45, %v33
    %v47 = vpop.permute.xlu0 %46
    %vm49 = vcmask 23552
    %v51 = vsel %vm49, %v28, 0
    %v54 = vsel %vm49, %v29, 0
    %v57 = vsel %vm49, %v30, 0
    %vm59 = vcmask 1042432
    %v61 = vsel %vm59, %v27, 0
    %63 = vmatprep.subr.mxu0 0.0
    %64 = vmatpush1.msra.mxu0 0.0
    %65 = vmatprep.subr.mxu0 0.0
    %66 = vmatpush1.msra.mxu0 0.0
    %67 = vmatprep.subr.mxu0 0.0
    %68 = vmatpush1.msra.mxu0 0.0
    %69 = vmatprep.subr.mxu0 0.0
    %70 = vmatpush1.msra.mxu0 0.0
    %71 = vmatprep.subr.mxu0 0.0
    %72 = vmatpush1.msra.mxu0 0.0
    %73 = vmatprep.subr.mxu0 0.0
    %74 = vmatpush1.msra.mxu0 0.0
    %75 = vmatprep.subr.mxu0 0.0
    %76 = vmatpush1.msra.mxu0 0.0
    %77 = vmatprep.subr.mxu0 0.0
    %78 = vmatpush1.msra.mxu0 0.0
    %79 = vmatprep.subr.mxu0 0.0
    %80 = vmatpush1.msra.mxu0 0.0
    %81 = vmatprep.subr.mxu0 0.0
    %82 = vmatpush1.msra.mxu0 0.0
    %83 = vmatprep.subr.mxu0 0.0
    %84 = vmatpush1.msra.mxu0 0.0
    %85 = vmatprep.subr.mxu0 0.0
    %86 = vmatpush1.msra.mxu0 0.0
    %87 = vmatprep.subr.mxu0 0.0
    %88 = vmatpush1.msra.mxu0 0.0
    %89 = vmatprep.subr.mxu0 0.0
    %90 = vmatpush1.msra.mxu0 0.0
    %91 = vmatprep.subr.mxu0 0.0
    %92 = vmatpush1.msra.mxu0 0.0
    %93 = vmatprep.subr.mxu0 0.0
    %94 = vmatpush1.msra.mxu0 %v61
    %95 = vmatprep.subr.mxu0 0.0
    %96 = vmatpush2.msra.mxu0 0.0
    %97 = vmatprep.subr.mxu0 0.0
    %98 = vmatpush2.msra.mxu0 0.0
    %99 = vmatprep.subr.mxu0 0.0
    %100 = vmatpush2.msra.mxu0 0.0
    %101 = vmatprep.subr.mxu0 0.0
    %102 = vmatpush2.msra.mxu0 0.0
    %103 = vmatprep.subr.mxu0 0.0
    %104 = vmatpush2.msra.mxu0 0.0
    %105 = vmatprep.subr.mxu0 0.0
    %106 = vmatpush2.msra.mxu0 0.0
    %107 = vmatprep.subr.mxu0 0.0
    %108 = vmatpush2.msra.mxu0 0.0
    %109 = vmatprep.subr.mxu0 0.0
    %110 = vmatpush2.msra.mxu0 0.0
    %111 = vmatprep.subr.mxu0 0.0
    %112 = vmatpush2.msra.mxu0 0.0
    %113 = vmatprep.subr.mxu0 0.0
    %114 = vmatpush2.msra.mxu0 0.0
    %115 = vmatprep.subr.mxu0 0.0
    %116 = vmatpush2.msra.mxu0 0.0
    %117 = vmatprep.subr.mxu0 0.0
    %118 = vmatpush2.msra.mxu0 0.0
    %119 = vmatprep.subr.mxu0 0.0
    %120 = vmatpush2.msra.mxu0 0.0
    %121 = vmatprep.subr.mxu0 0.0
    %122 = vmatpush2.msra.mxu0 0.0
    %123 = vmatprep.subr.mxu0 0.0
    %124 = vmatpush2.msra.mxu0 0.0
    %125 = vmatprep.subr.mxu0 0.0
    %126 = vmatpush2.msra.mxu0 0.0
    %127 = vmatprep.mubr.f32.mxu0 0.0
    %128 = vmatmul.mubr.f32.gmra.mxu0 %v51
    %v129 = vpop.f32.mrf.mxu0
    %v130 = vadd.f32 %v37, %v129
    %v131 = vpop.f32.mrf.mxu0
    %132 = vmatprep.mubr.f32.mxu0 0.0
    %133 = vmatmul.mubr.f32.gmra.mxu0 %v54
    %v134 = vpop.f32.mrf.mxu0
    %v135 = vadd.f32 %v42, %v134
    %v136 = vpop.f32.mrf.mxu0
    %137 = vmatprep.mubr.f32.mxu0 0.0
    %138 = vmatmul.mubr.f32.gmra.mxu0 %v57
    %v139 = vpop.f32.mrf.mxu0
    %v140 = vadd.f32 %v47, %v139
    %v141 = vpop.f32.mrf.mxu0
    %142 = vdwg.mxu0
    %v143 = vtanh.pop %v130
    %v144 = vtanh.pop %v135
    %v145 = vtanh.pop %v140
    %v146 = vld [vmem:[%s3] sm:$0xff]
    %v147 = vld [vmem:[%s3 + $0x8] sm:$0xff]
    %v148 = vld [vmem:[%s3 + $0x10] sm:$0xf]
    %v149 = vld [vmem:[%s4] sm:$0xff]
    %v150 = vld [vmem:[%s4 + $0x8] sm:$0xff]
    %v151 = vld [vmem:[%s4 + $0x10] sm:$0xf]
    %153 = vset.pattern.permute.xlu0 0
    %154 = vperm.xlu0 %153, %v149
    %v155 = vpop.permute.xlu0 %154
    %158 = vset.pattern.permute.xlu0 0
    %159 = vperm.xlu0 %158, %v150
    %v160 = vpop.permute.xlu0 %159
    %163 = vset.pattern.permute.xlu0 0
    %164 = vperm.xlu0 %163, %v151
    %v165 = vpop.permute.xlu0 %164
    %vm167 = vcmask 162816
    %v169 = vsel %vm167, %v146, 0
    %v172 = vsel %vm167, %v147, 0
    %v175 = vsel %vm167, %v148, 0
    %vm177 = vcmask 1043456
    %v179 = vsel %vm177, %v145, 0
    %181 = vmatprep.subr.mxu0 0.0
    %182 = vmatpush1.msra.mxu0 0.0
    %183 = vmatprep.subr.mxu0 0.0
    %184 = vmatpush1.msra.mxu0 0.0
    %185 = vmatprep.subr.mxu0 0.0
    %186 = vmatpush1.msra.mxu0 0.0
    %187 = vmatprep.subr.mxu0 0.0
    %188 = vmatpush1.msra.mxu0 0.0
    %189 = vmatprep.subr.mxu0 0.0
    %190 = vmatpush1.msra.mxu0 0.0
    %191 = vmatprep.subr.mxu0 0.0
    %192 = vmatpush1.msra.mxu0 0.0
    %193 = vmatprep.subr.mxu0 0.0
    %194 = vmatpush1.msra.mxu0 0.0
    %195 = vmatprep.subr.mxu0 0.0
    %196 = vmatpush1.msra.mxu0 0.0
    %197 = vmatprep.subr.mxu0 0.0
    %198 = vmatpush1.msra.mxu0 0.0
    %199 = vmatprep.subr.mxu0 0.0
    %200 = vmatpush1.msra.mxu0 0.0
    %201 = vmatprep.subr.mxu0 0.0
    %202 = vmatpush1.msra.mxu0 0.0
    %203 = vmatprep.subr.mxu0 0.0
    %204 = vmatpush1.msra.mxu0 0.0
    %205 = vmatprep.subr.mxu0 0.0
    %206 = vmatpush1.msra.mxu0 0.0
    %207 = vmatprep.subr.mxu0 0.0
    %208 = vmatpush1.msra.mxu0 %v179
    %209 = vmatprep.subr.mxu0 0.0
    %210 = vmatpush1.msra.mxu0 %v144
    %211 = vmatprep.subr.mxu0 0.0
    %212 = vmatpush1.msra.mxu0 %v143
    %213 = vmatprep.subr.mxu0 0.0
    %214 = vmatpush2.msra.mxu0 0.0
    %215 = vmatprep.subr.mxu0 0.0
    %216 = vmatpush2.msra.mxu0 0.0
    %217 = vmatprep.subr.mxu0 0.0
    %218 = vmatpush2.msra.mxu0 0.0
    %219 = vmatprep.subr.mxu0 0.0
    %220 = vmatpush2.msra.mxu0 0.0
    %221 = vmatprep.subr.mxu0 0.0
    %222 = vmatpush2.msra.mxu0 0.0
    %223 = vmatprep.subr.mxu0 0.0
    %224 = vmatpush2.msra.mxu0 0.0
    %225 = vmatprep.subr.mxu0 0.0
    %226 = vmatpush2.msra.mxu0 0.0
    %227 = vmatprep.subr.mxu0 0.0
    %228 = vmatpush2.msra.mxu0 0.0
    %229 = vmatprep.subr.mxu0 0.0
    %230 = vmatpush2.msra.mxu0 0.0
    %231 = vmatprep.subr.mxu0 0.0
    %232 = vmatpush2.msra.mxu0 0.0
    %233 = vmatprep.subr.mxu0 0.0
    %234 = vmatpush2.msra.mxu0 0.0
    %235 = vmatprep.subr.mxu0 0.0
    %236 = vmatpush2.msra.mxu0 0.0
    %237 = vmatprep.subr.mxu0 0.0
    %238 = vmatpush2.msra.mxu0 0.0
    %239 = vmatprep.subr.mxu0 0.0
    %240 = vmatpush2.msra.mxu0 0.0
    %241 = vmatprep.subr.mxu0 0.0
    %242 = vmatpush2.msra.mxu0 0.0
    %243 = vmatprep.subr.mxu0 0.0
    %244 = vmatpush2.msra.mxu0 0.0
    %245 = vmatprep.mubr.f32.mxu0 0.0
    %246 = vmatmul.mubr.f32.gmra.mxu0 %v169
    %v247 = vpop.f32.mrf.mxu0
    %v248 = vadd.f32 %v155, %v247
    %v249 = vpop.f32.mrf.mxu0
    %250 = vmatprep.mubr.f32.mxu0 0.0
    %251 = vmatmul.mubr.f32.gmra.mxu0 %v172
    %v252 = vpop.f32.mrf.mxu0
    %v253 = vadd.f32 %v160, %v252
    %v254 = vpop.f32.mrf.mxu0
    %255 = vmatprep.mubr.f32.mxu0 0.0
    %256 = vmatmul.mubr.f32.gmra.mxu0 %v175
    %v257 = vpop.f32.mrf.mxu0
    %v258 = vadd.f32 %v165, %v257
    %v259 = vpop.f32.mrf.mxu0
    %260 = vdwg.mxu0
    %v261 = vtanh.pop %v248
    %v262 = vtanh.pop %v253
    %v263 = vtanh.pop %v258
    %v264 = vld [vmem:[%s5] sm:$0x3]
    %v265 = vld [vmem:[%s6] sm:$0x3]
    %267 = vset.pattern.permute.xlu0 0
    %268 = vperm.xlu0 %267, %v265
    %v269 = vpop.permute.xlu0 %268
    %v272 = vsel %vm167, %v264, 0
    %v275 = vsel %vm177, %v263, 0
    %277 = vmatprep.subr.mxu0 0.0
    %278 = vmatpush1.msra.mxu0 0.0
    %279 = vmatprep.subr.mxu0 0.0
    %280 = vmatpush1.msra.mxu0 0.0
    %281 = vmatprep.subr.mxu0 0.0
    %282 = vmatpush1.msra.mxu0 0.0
    %283 = vmatprep.subr.mxu0 0.0
    %284 = vmatpush1.msra.mxu0 0.0
    %285 = vmatprep.subr.mxu0 0.0
    %286 = vmatpush1.msra.mxu0 0.0
    %287 = vmatprep.subr.mxu0 0.0
    %288 = vmatpush1.msra.mxu0 0.0
    %289 = vmatprep.subr.mxu0 0.0
    %290 = vmatpush1.msra.mxu0 0.0
    %291 = vmatprep.subr.mxu0 0.0
    %292 = vmatpush1.msra.mxu0 0.0
    %293 = vmatprep.subr.mxu0 0.0
    %294 = vmatpush1.msra.mxu0 0.0
    %295 = vmatprep.subr.mxu0 0.0
    %296 = vmatpush1.msra.mxu0 0.0
    %297 = vmatprep.subr.mxu0 0.0
    %298 = vmatpush1.msra.mxu0 0.0
    %299 = vmatprep.subr.mxu0 0.0
    %300 = vmatpush1.msra.mxu0 0.0
    %301 = vmatprep.subr.mxu0 0.0
    %302 = vmatpush1.msra.mxu0 0.0
    %303 = vmatprep.subr.mxu0 0.0
    %304 = vmatpush1.msra.mxu0 %v275
    %305 = vmatprep.subr.mxu0 0.0
    %306 = vmatpush1.msra.mxu0 %v262
    %307 = vmatprep.subr.mxu0 0.0
    %308 = vmatpush1.msra.mxu0 %v261
    %309 = vmatprep.subr.mxu0 0.0
    %310 = vmatpush2.msra.mxu0 0.0
    %311 = vmatprep.subr.mxu0 0.0
    %312 = vmatpush2.msra.mxu0 0.0
    %313 = vmatprep.subr.mxu0 0.0
    %314 = vmatpush2.msra.mxu0 0.0
    %315 = vmatprep.subr.mxu0 0.0
    %316 = vmatpush2.msra.mxu0 0.0
    %317 = vmatprep.subr.mxu0 0.0
    %318 = vmatpush2.msra.mxu0 0.0
    %319 = vmatprep.subr.mxu0 0.0
    %320 = vmatpush2.msra.mxu0 0.0
    %321 = vmatprep.subr.mxu0 0.0
    %322 = vmatpush2.msra.mxu0 0.0
    %323 = vmatprep.subr.mxu0 0.0
    %324 = vmatpush2.msra.mxu0 0.0
    %325 = vmatprep.subr.mxu0 0.0
    %326 = vmatpush2.msra.mxu0 0.0
    %327 = vmatprep.subr.mxu0 0.0
    %328 = vmatpush2.msra.mxu0 0.0
    %329 = vmatprep.subr.mxu0 0.0
    %330 = vmatpush2.msra.mxu0 0.0
    %331 = vmatprep.subr.mxu0 0.0
    %332 = vmatpush2.msra.mxu0 0.0
    %333 = vmatprep.subr.mxu0 0.0
    %334 = vmatpush2.msra.mxu0 0.0
    %335 = vmatprep.subr.mxu0 0.0
    %336 = vmatpush2.msra.mxu0 0.0
    %337 = vmatprep.subr.mxu0 0.0
    %338 = vmatpush2.msra.mxu0 0.0
    %339 = vmatprep.subr.mxu0 0.0
    %340 = vmatpush2.msra.mxu0 0.0
    %341 = vmatprep.mubr.f32.mxu0 0.0
    %342 = vmatmul.mubr.f32.gmra.mxu0 %v272
    %v343 = vpop.f32.mrf.mxu0
    %v344 = vadd.f32 %v269, %v343
    %v345 = vpop.f32.mrf.mxu0
    %346 = vdwg.mxu0
    %347 = vst [vmem:[#allocation2] sm:$0x3] %v344
    // Predicated region
    $region30: #{tpu_custom_call.1} parent=1 // pred_check
      _
    $region31: #{tpu_custom_call.1} parent=1 // pred_check_branch
      %349 = sbr.rel (0) target = $region33
    $region32: #{tpu_custom_call.1} parent=1 // pred_region
      %s351 = ssub.s32 32, 32
      %352 = vsyncadd [#allocation3], %s351
      %s354 = sshll.u32 [#allocation2], 4
      %s355 = int_to_ptr.vmem [resolvable:$true] %s354
      %357 = dma.vmem_to_hbm [thread:$0]  %s355, 32, %s7, [#allocation3]
    $region33: #{tpu_custom_call.1} parent=1 // pred_fallthru
      _
    // Predicated region
    $region34: #{tpu_custom_call.1} parent=1 // pred_check
      _
    $region35: #{tpu_custom_call.1} parent=1 // pred_check_branch
      %359 = sbr.rel (0) target = $region37
    $region36: #{tpu_custom_call.1} parent=1 // pred_region
      %360 = dma.done [#allocation3], 32
    $region37: #{tpu_custom_call.1} parent=1 // pred_fallthru
      _
    %361 = vsyncpa [#allocation3], 1

</llo_original>
